<compile_context>
chip_gen: v5e
topology: v5e:2x2
jax: 0.10.0
libtpu: 0.0.40
codegen_flags: <defaults>
</compile_context>

<pallas_src>
import jax
import jax.numpy as jnp
from jax.experimental import pallas as pl
from jax.experimental.pallas import tpu as pltpu


# ----------------------------------------------------------------------------
# helpers
# ----------------------------------------------------------------------------
TM_MAX = 512          # output-row tile (review: larger tm -> B streamed less)
TN_MAX = 256          # output-col tile (multiple of 128)
SINGLE_K_MAX = 4096   # below this, run the whole reduction in one step


def _round_up(x, m):
    return (x + m - 1) // m * m


def _vmem_limit(est_bytes):
    # Derived from actual tile bytes; capped well under v7x's 64 MiB VMEM/TC.
    return int(min(64 * 2**20, max(16 * 2**20, 2 * est_bytes)))


# ----------------------------------------------------------------------------
# Tiled Pallas GEMM with fused bias / residual / lhs-add epilogue
# ----------------------------------------------------------------------------
def _make_gemm_single_k_kernel(has_lhs2, has_residual):
    """out = (A [+ A2]) @ B + bias [+ res]   -- single reduction step."""

    def kernel(*refs):
        idx = 0
        a_ref = refs[idx]; idx += 1
        a2_ref = None
        if has_lhs2:
            a2_ref = refs[idx]; idx += 1
        b_ref = refs[idx]; idx += 1
        bias_ref = refs[idx]; idx += 1
        res_ref = None
        if has_residual:
            res_ref = refs[idx]; idx += 1
        o_ref = refs[idx]

        a = a_ref[...]
        if has_lhs2:
            a = a + a2_ref[...]                       # fused (x + skip) add
        out = jnp.dot(a, b_ref[...], preferred_element_type=jnp.float32)
        out = out + bias_ref[...]                     # fused bias
        if has_residual:
            out = out + res_ref[...].astype(jnp.float32)   # fused residual
        o_ref[...] = out.astype(o_ref.dtype)

    return kernel


def _make_gemm_multi_k_kernel(has_lhs2, has_residual):
    """Multi-K-step variant with a float32 VMEM accumulator (K > SINGLE_K_MAX)."""

    def kernel(*refs):
        idx = 0
        a_ref = refs[idx]; idx += 1
        a2_ref = None
        if has_lhs2:
            a2_ref = refs[idx]; idx += 1
        b_ref = refs[idx]; idx += 1
        bias_ref = refs[idx]; idx += 1
        res_ref = None
        if has_residual:
            res_ref = refs[idx]; idx += 1
        o_ref = refs[idx]; idx += 1
        acc_ref = refs[idx]

        k = pl.program_id(2)

        @pl.when(k == 0)
        def _init():
            acc_ref[...] = jnp.zeros_like(acc_ref)

        a = a_ref[...]
        if has_lhs2:
            a = a + a2_ref[...]
        acc_ref[...] += jnp.dot(a, b_ref[...],
                                preferred_element_type=jnp.float32)

        @pl.when(k == pl.num_programs(2) - 1)
        def _store():
            out = acc_ref[...] + bias_ref[...]
            if has_residual:
                out = out + res_ref[...].astype(jnp.float32)
            o_ref[...] = out.astype(o_ref.dtype)

    return kernel


def matmul_fused(a, b, bias, a2=None, residual=None, out_dtype=jnp.bfloat16):
    """(M,K) @ (K,N) + bias with optional fused (a+a2) and output residual.

    a, a2: (M,K); b: (K,N); bias: (N,); residual: (M,N).  A/B/A2 computed in
    bfloat16, accumulation float32, output stored as `out_dtype`.
    """
    M, K = a.shape
    _, N = b.shape

    single_k = K <= SINGLE_K_MAX
    if single_k:
        Kp = _round_up(K, 16)                 # bf16 sublane packing
        tk = Kp
    else:
        Kp = _round_up(K, 128)
        tk = next(t for t in (512, 256, 128) if Kp % t == 0)

    tm = min(TM_MAX, _round_up(M, 16))
    Mp = _round_up(M, tm)
    tn = min(TN_MAX, _round_up(N, 128))
    Np = _round_up(N, tn)

    a_p = jnp.pad(a.astype(jnp.bfloat16), ((0, Mp - M), (0, Kp - K)))
    b_p = jnp.pad(b.astype(jnp.bfloat16), ((0, Kp - K), (0, Np - N)))
    bias_p = jnp.pad(bias.astype(jnp.float32), (0, Np - N)).reshape(1, Np)

    if single_k:
        a_spec = pl.BlockSpec((tm, Kp), lambda i, j: (i, 0))
        b_spec = pl.BlockSpec((Kp, tn), lambda i, j: (0, j))
        bias_spec = pl.BlockSpec((1, tn), lambda i, j: (0, j))
        res_spec = pl.BlockSpec((tm, tn), lambda i, j: (i, j))
        out_spec = pl.BlockSpec((tm, tn), lambda i, j: (i, j))
        grid = (Mp // tm, Np // tn)
        scratch = []
        semantics = ("parallel", "parallel")
        kernel = _make_gemm_single_k_kernel(a2 is not None, residual is not None)
    else:
        a_spec = pl.BlockSpec((tm, tk), lambda i, j, k: (i, k))
        b_spec = pl.BlockSpec((tk, tn), lambda i, j, k: (k, j))
        bias_spec = pl.BlockSpec((1, tn), lambda i, j, k: (0, j))
        res_spec = pl.BlockSpec((tm, tn), lambda i, j, k: (i, j))
        out_spec = pl.BlockSpec((tm, tn), lambda i, j, k: (i, j))
        grid = (Mp // tm, Np // tn, Kp // tk)
        scratch = [pltpu.VMEM((tm, tn), jnp.float32)]
        semantics = ("parallel", "parallel", "arbitrary")
        kernel = _make_gemm_multi_k_kernel(a2 is not None, residual is not None)

    inputs = [a_p]
    in_specs = [a_spec]
    if a2 is not None:
        inputs.append(jnp.pad(a2.astype(jnp.bfloat16), ((0, Mp - M), (0, Kp - K))))
        in_specs.append(a_spec)
    inputs.append(b_p); in_specs.append(b_spec)
    inputs.append(bias_p); in_specs.append(bias_spec)
    if residual is not None:
        inputs.append(jnp.pad(residual.astype(jnp.bfloat16),
                              ((0, Mp - M), (0, Np - N))))
        in_specs.append(res_spec)

    out_bytes = 2 if out_dtype == jnp.bfloat16 else 4
    est = 2 * (tm * tk * 2 * (2 if a2 is not None else 1)
               + tk * tn * 2 + tn * 4
               + (tm * tn * 2 if residual is not None else 0)
               + tm * tn * out_bytes)
    if not single_k:
        est += tm * tn * 4

    flops = 2 * Mp * Np * Kp
    bytes_accessed = (Mp * Kp * 2 * (2 if a2 is not None else 1)
                      + Kp * Np * 2 + Np * 4
                      + (Mp * Np * 2 if residual is not None else 0)
                      + Mp * Np * out_bytes)

    out = pl.pallas_call(
        kernel,
        out_shape=jax.ShapeDtypeStruct((Mp, Np), out_dtype),
        grid=grid,
        in_specs=in_specs,
        out_specs=out_spec,
        scratch_shapes=scratch,
        compiler_params=pltpu.CompilerParams(
            dimension_semantics=semantics,
            vmem_limit_bytes=_vmem_limit(est)),
        cost_estimate=pl.CostEstimate(flops=flops, transcendentals=0,
                                      bytes_accessed=int(bytes_accessed)),
    )(*inputs)
    return out[:M, :N]


# ----------------------------------------------------------------------------
# GEMM-based conv (stride-2 3x3 convs and all 1x1 convs)
# ----------------------------------------------------------------------------
def conv2d_gemm(x, w, b, stride=1, padding=0, residual=None, x2=None,
                out_dtype=jnp.bfloat16):
    """x, x2: (N,H,W,Cin); w: (Cout,Cin,KH,KW); b: (Cout,).

    Computes conv(x + x2) + residual; the adds are fused into the Pallas GEMM.
    """
    N, H, W, Cin = x.shape
    Cout, _, KH, KW = w.shape
    Ho = (H + 2 * padding - KH) // stride + 1
    Wo = (W + 2 * padding - KW) // stride + 1
    M = N * Ho * Wo

    def to_mat(t):
        t = t.astype(jnp.bfloat16)                       # halve im2col traffic
        if padding:
            t = jnp.pad(t, ((0, 0), (padding, padding),
                            (padding, padding), (0, 0)))
        if KH == 1 and KW == 1 and stride == 1:
            return t.reshape(M, Cin)                     # 1x1: no expansion
        cols = []
        for kh in range(KH):
            for kw in range(KW):
                cols.append(t[:, kh:kh + (Ho - 1) * stride + 1:stride,
                                 kw:kw + (Wo - 1) * stride + 1:stride, :])
        return jnp.concatenate(cols, axis=-1).reshape(M, KH * KW * Cin)

    a = to_mat(x)
    a2 = to_mat(x2) if x2 is not None else None
    w_mat = jnp.transpose(w, (2, 3, 1, 0)).reshape(KH * KW * Cin, Cout)
    res = residual.reshape(M, Cout) if residual is not None else None

    out = matmul_fused(a, w_mat, b, a2=a2, residual=res, out_dtype=out_dtype)
    return out.reshape(N, Ho, Wo, Cout)


# ----------------------------------------------------------------------------
# Stride-1 / pad-1 3x3 conv with in-kernel patch gathering (no im2col in HBM)
# ----------------------------------------------------------------------------
def _pick_rows(H, W, C, Cout, budget=4 * 2**20):
    """Output rows per grid step: largest divisor of H whose buffers fit VMEM
    and whose output block satisfies the (8,128) tiling rule."""
    cands = sorted({d for d in (H, 32, 16, 8, 4, 2, 1) if d <= H and H % d == 0},
                   reverse=True)
    for th in cands:
        vm = 2 * (th + 2) * (W + 2) * C * 2 + 2 * th * W * Cout * 4
        if vm <= budget and (th == H or (th * W) % 8 == 0):
            return th
    return cands[-1]


def conv3x3_s1(x, w, b, out_dtype=jnp.bfloat16, in_scale=None, in_shift=None):
    """3x3 / stride 1 / pad 1 conv; patches gathered inside the kernel.

    x: (N,H,W,C); w: (Cout,C,3,3); b: (Cout,).  If given, the per-channel
    affine x*in_scale + in_shift (a folded BatchNorm) is applied while the
    padded HBM input is materialized (fused by XLA into the pad), so BN costs
    no extra HBM pass.
    """
    N, H, W, C = x.shape
    Cout = w.shape[0]
    Wp = W + 2

    xf = x
    if in_scale is not None:
        xf = xf.astype(jnp.float32) * in_scale + in_shift
    xp = jnp.pad(xf.astype(jnp.bfloat16), ((0, 0), (1, 1), (1, 1), (0, 0)))

    wk = jnp.transpose(w, (2, 3, 1, 0)).astype(jnp.bfloat16)    # (3,3,C,Cout)
    bias = b.astype(jnp.float32).reshape(1, Cout)

    th = _pick_rows(H, W, C, Cout)

    def kernel(xp_hbm, w_ref, b_ref, o_ref, xbuf, sem):
        n = pl.program_id(0)
        hb = pl.program_id(1)
        # Halo DMA: th output rows need th+2 padded input rows.
        cp = pltpu.make_async_copy(
            xp_hbm.at[n, pl.ds(hb * th, th + 2)], xbuf, sem)
        cp.start()
        cp.wait()
        xin = xbuf[...]                                   # (th+2, Wp, C) bf16
        acc = jnp.zeros((th * W, Cout), jnp.float32)
        for kh in range(3):
            for kw in range(3):
                patch = xin[kh:kh + th, kw:kw + W, :].reshape(th * W, C)
                acc = acc + jnp.dot(patch, w_ref[kh, kw],
                                    preferred_element_type=jnp.float32)
        o_ref[0] = (acc + b_ref[...]).astype(o_ref.dtype)

    out_bytes = 2 if out_dtype == jnp.bfloat16 else 4
    est = (2 * (th + 2) * Wp * C * 2 + 9 * C * Cout * 2 + Cout * 4
           + 2 * th * W * Cout * out_bytes)
    flops = 2 * N * H * W * 9 * C * Cout
    bytes_accessed = (N * (H + 2) * Wp * C * 2 + 9 * C * Cout * 2
                      + N * H * W * Cout * out_bytes)

    out = pl.pallas_call(
        kernel,
        out_shape=jax.ShapeDtypeStruct((N, H * W, Cout), out_dtype),
        grid=(N, H // th),
        in_specs=[
            pl.BlockSpec(memory_space=pl.ANY),                       # raw HBM
            pl.BlockSpec((3, 3, C, Cout), lambda n, hb: (0, 0, 0, 0)),
            pl.BlockSpec((1, Cout), lambda n, hb: (0, 0)),
        ],
        out_specs=pl.BlockSpec((1, th * W, Cout), lambda n, hb: (n, hb, 0)),
        scratch_shapes=[pltpu.VMEM((th + 2, Wp, C), jnp.bfloat16),
                        pltpu.SemaphoreType.DMA(())],
        compiler_params=pltpu.CompilerParams(
            dimension_semantics=("parallel", "arbitrary"),
            vmem_limit_bytes=_vmem_limit(est)),
        cost_estimate=pl.CostEstimate(flops=flops, transcendentals=0,
                                      bytes_accessed=int(bytes_accessed)),
    )(xp, wk, bias)
    return out.reshape(N, H, W, Cout)


# ----------------------------------------------------------------------------
# BatchNorm (training-mode stats) folded into the consumer's input prep
# ----------------------------------------------------------------------------
def bn_affine(x, gamma, beta, eps=1e-5):
    """Per-channel (scale, shift) s.t.  bn(x) == x*scale + shift  (train mode)."""
    xf = x.astype(jnp.float32)
    mean = jnp.mean(xf, axis=(0, 1, 2))
    var = jnp.mean(jnp.square(xf - mean), axis=(0, 1, 2))   # biased, as BN uses
    scale = gamma * jax.lax.rsqrt(var + eps)
    shift = beta - mean * scale
    return scale, shift


def upsample2x_affine(x, scale, shift):
    """2x nearest upsample of bn(x); the BN affine fuses into this pass."""
    xf = x.astype(jnp.float32) * scale + shift
    xf = jnp.repeat(jnp.repeat(xf, 2, axis=1), 2, axis=2)
    return xf.astype(jnp.bfloat16)


# ----------------------------------------------------------------------------
# Parameter initialization (deterministic, torch default scales)
# ----------------------------------------------------------------------------
def init_conv(key, cout, cin, kh, kw):
    k1, k2 = jax.random.split(key)
    fan_in = cin * kh * kw
    bound = 1.0 / (fan_in ** 0.5)
    w = jax.random.uniform(k1, (cout, cin, kh, kw), jnp.float32, -bound, bound)
    b = jax.random.uniform(k2, (cout,), jnp.float32, -bound, bound)
    return w, b


def init_bn(c):
    return jnp.ones((c,), jnp.float32), jnp.zeros((c,), jnp.float32)


def init_params(key):
    keys = jax.random.split(key, 32)
    ki = iter(keys)
    P = {}
    P["conv_1"] = init_conv(next(ki), 64, 3, 3, 3)
    P["conv_2"] = init_conv(next(ki), 128, 64, 3, 3)
    P["conv_3"] = init_conv(next(ki), 256, 128, 3, 3)
    P["conv_4"] = init_conv(next(ki), 512, 256, 3, 3)
    P["conv_5"] = init_conv(next(ki), 512, 512, 1, 1)
    P["conv_6"] = init_conv(next(ki), 32, 32, 3, 3)
    P["conv_7"] = init_conv(next(ki), 32, 32, 3, 3)
    P["conv_8"] = init_conv(next(ki), 16, 32, 3, 3)
    P["conv_9"] = init_conv(next(ki), 16, 16, 3, 3)

    def up_block(prefix, cin, cmid, cout):
        P[prefix + "_c1"] = init_conv(next(ki), cmid, cin, 1, 1)
        P[prefix + "_bn1"] = init_bn(cmid)
        P[prefix + "_c2"] = init_conv(next(ki), cout, cmid, 3, 3)
        P[prefix + "_bn2"] = init_bn(cout)

    up_block("up1", 512, 512, 256)
    up_block("up2", 256, 256, 128)
    up_block("up3", 128, 128, 64)
    up_block("upc1", 64, 64, 32)
    return P


# ----------------------------------------------------------------------------
# CRAFT forward
# ----------------------------------------------------------------------------
def craft_forward(image_nchw, P):
    x = jnp.transpose(image_nchw, (0, 2, 3, 1))  # NCHW -> NHWC

    conv1 = conv2d_gemm(x, *P["conv_1"], stride=2, padding=1)
    conv2 = conv2d_gemm(conv1, *P["conv_2"], stride=2, padding=1)
    conv3 = conv2d_gemm(conv2, *P["conv_3"], stride=2, padding=1)
    conv4 = conv2d_gemm(conv3, *P["conv_4"], stride=2, padding=1)
    # conv_5 with the (conv4 + conv5) skip fused into the GEMM epilogue.
    h0 = conv2d_gemm(conv4, *P["conv_5"], stride=1, padding=0, residual=conv4)

    def up_block(xin, skip, prefix):
        w1, b1 = P[prefix + "_c1"]
        g1, be1 = P[prefix + "_bn1"]
        w2, b2 = P[prefix + "_c2"]
        g2, be2 = P[prefix + "_bn2"]
        # (xin + skip) fused into the 1x1 conv's GEMM (in-kernel lhs add).
        t1 = conv2d_gemm(xin, w1, b1, stride=1, padding=0, x2=skip)
        s1, h1 = bn_affine(t1, g1, be1)
        # bn1 folded into the 3x3 conv's padded-input materialization.
        t2 = conv3x3_s1(t1, w2, b2, in_scale=s1, in_shift=h1)
        s2, h2 = bn_affine(t2, g2, be2)
        return t2, s2, h2                         # bn2 applied by the consumer

    t, s, h = up_block(h0, None, "up1")
    t, s, h = up_block(upsample2x_affine(t, s, h), conv3, "up2")
    t, s, h = up_block(upsample2x_affine(t, s, h), conv2, "up3")
    t, s, h = up_block(upsample2x_affine(t, s, h), conv1, "upc1")

    # upc1's bn2 folded into conv_6's padded-input materialization.
    c6 = conv3x3_s1(t, *P["conv_6"], in_scale=s, in_shift=h)
    c7 = conv3x3_s1(c6, *P["conv_7"])
    c8 = conv3x3_s1(c7, *P["conv_8"])
    c9 = conv3x3_s1(c8, *P["conv_9"], out_dtype=jnp.float32)

    return jnp.transpose(c9, (0, 3, 1, 2))        # NHWC -> NCHW


if __name__ == "__main__":
    key = jax.random.PRNGKey(0)
    k_params, k_img = jax.random.split(key)

    # --- self-check 1: GEMM conv path (stride 2) vs XLA reference ------------
    xc = jax.random.normal(jax.random.PRNGKey(1), (1, 8, 8, 4), jnp.float32)
    wc = 0.1 * jax.random.normal(jax.random.PRNGKey(2), (8, 4, 3, 3), jnp.float32)
    bc = 0.1 * jax.random.normal(jax.random.PRNGKey(3), (8,), jnp.float32)
    mine = conv2d_gemm(xc, wc, bc, stride=2, padding=1, out_dtype=jnp.float32)
    ref = jax.lax.conv_general_dilated(
        xc, jnp.transpose(wc, (2, 3, 1, 0)), (2, 2), ((1, 1), (1, 1)),
        dimension_numbers=("NHWC", "HWIO", "NHWC")) + bc
    err = float(jnp.max(jnp.abs(mine - ref)))
    scale = float(jnp.max(jnp.abs(ref))) + 1e-6
    assert err <= 0.05 * scale + 0.05, (err, scale)

    # --- self-check 2: in-kernel-gather 3x3 conv vs XLA reference ------------
    x3 = jax.random.normal(jax.random.PRNGKey(4), (1, 8, 8, 16), jnp.float32)
    w3 = 0.1 * jax.random.normal(jax.random.PRNGKey(5), (16, 16, 3, 3), jnp.float32)
    b3 = 0.1 * jax.random.normal(jax.random.PRNGKey(6), (16,), jnp.float32)
    mine3 = conv3x3_s1(x3, w3, b3, out_dtype=jnp.float32)
    ref3 = jax.lax.conv_general_dilated(
        x3, jnp.transpose(w3, (2, 3, 1, 0)), (1, 1), ((1, 1), (1, 1)),
        dimension_numbers=("NHWC", "HWIO", "NHWC")) + b3
    err3 = float(jnp.max(jnp.abs(mine3 - ref3)))
    scale3 = float(jnp.max(jnp.abs(ref3))) + 1e-6
    assert err3 <= 0.05 * scale3 + 0.05, (err3, scale3)

    # --- full forward: 4 stride-2 convs => H, W divisible by 16 --------------
    image = jax.random.normal(k_img, (2, 3, 32, 32), jnp.float32)
    params = init_params(k_params)

    out = jax.jit(craft_forward)(image, params)
    out = jax.block_until_ready(out)

    assert out.shape == (2, 16, 16, 16), out.shape
    assert out.dtype == jnp.float32
    assert bool(jnp.all(jnp.isfinite(out)))
    print("KERNEL_OK")
</pallas_src>

<mosaic_0001>
module attributes {stable_mosaic.version = 11 : i64} {
  func.func @kernel(%arg0: i32, %arg1: i32, %arg2: memref<16x48xbf16, #tpu.memory_space<vmem>>, %arg3: memref<48x128xbf16, #tpu.memory_space<vmem>>, %arg4: memref<1x128xf32, #tpu.memory_space<vmem>>, %arg5: memref<16x128xf32, #tpu.memory_space<vmem>>) attributes {dimension_semantics = [#tpu.dimension_semantics<parallel>, #tpu.dimension_semantics<parallel>], iteration_bounds = array<i64: 1, 1>, scalar_prefetch = 0 : i64, scratch_operands = 0 : i64, tpu.core_type = #tpu.core_type<tc>, window_params = [{transform_indices = @transform_0, window_bounds = array<i64: 16, 48>}, {transform_indices = @transform_1, window_bounds = array<i64: 48, 128>}, {transform_indices = @transform_2, window_bounds = array<i64: 1, 128>}, {transform_indices = @transform_3, window_bounds = array<i64: 16, 128>}]} {
    %c0 = arith.constant 0 : index
    %c0_0 = arith.constant 0 : index
    %0 = vector.load %arg2[%c0, %c0_0] : memref<16x48xbf16, #tpu.memory_space<vmem>>, vector<16x48xbf16>
    %c0_1 = arith.constant 0 : index
    %c0_2 = arith.constant 0 : index
    %1 = vector.load %arg3[%c0_1, %c0_2] : memref<48x128xbf16, #tpu.memory_space<vmem>>, vector<48x128xbf16>
    %cst = arith.constant dense<0.000000e+00> : vector<16x128xf32>
    %2 = tpu.matmul %0, %1, %cst {dimension_numbers = #tpu.dot_dimension_numbers<[1], [0], [0], [1], [0, 0, 1, 1], [], []>} : vector<16x48xbf16>, vector<48x128xbf16>, vector<16x128xf32> -> vector<16x128xf32>
    %c0_3 = arith.constant 0 : index
    %c0_4 = arith.constant 0 : index
    %3 = vector.load %arg4[%c0_3, %c0_4] : memref<1x128xf32, #tpu.memory_space<vmem>>, vector<1x128xf32>
    %4 = vector.broadcast %3 : vector<1x128xf32> to vector<16x128xf32>
    %5 = arith.addf %2, %4 : vector<16x128xf32>
    %c0_5 = arith.constant 0 : index
    %c0_6 = arith.constant 0 : index
    %6 = vector.load %arg5[%c0_5, %c0_6] : memref<16x128xf32, #tpu.memory_space<vmem>>, vector<16x128xf32>
    tpu.vector_store %arg5[%c0_5, %c0_6], %5 {strides = array<i32>} : memref<16x128xf32, #tpu.memory_space<vmem>>, vector<16x128xf32>,
    return
  }
  func.func @transform_0(%arg0: i32, %arg1: i32) -> (i32, i32) {
    %c0_i32 = arith.constant 0 : i32
    %c0_i32_0 = arith.constant 0 : i32
    return %arg0, %c0_i32 : i32, i32
  }
  func.func @transform_1(%arg0: i32, %arg1: i32) -> (i32, i32) {
    %c0_i32 = arith.constant 0 : i32
    %c0_i32_0 = arith.constant 0 : i32
    return %c0_i32, %arg1 : i32, i32
  }
  func.func @transform_2(%arg0: i32, %arg1: i32) -> (i32, i32) {
    %c0_i32 = arith.constant 0 : i32
    %c0_i32_0 = arith.constant 0 : i32
    return %c0_i32, %arg1 : i32, i32
  }
  func.func @transform_3(%arg0: i32, %arg1: i32) -> (i32, i32) {
    %c0_i32 = arith.constant 0 : i32
    return %arg0, %arg1 : i32, i32
  }
}

</mosaic_0001>

<llo_original>
// kernel: tpu_custom_call.1
$region0: #{tpu_custom_call.1}
  #allocation0 [shape = 'u32[]', space=smem, size = 0x4, offset = 0x4, fixed_abs, tag = 'smem constant byte address 0x4 - core index']
  #allocation1 [shape = 'u32[72,128]{1,0:T(1,128)}', space=vmem, size = 0x9000, scoped, tag = 'internal scratch']
  %s0 = inlined_call_operand.hbm [shape: bf16[16,48], index: 0, kind: input, shape index: {}]
  %s1 = inlined_call_operand.hbm [shape: bf16[48,128], index: 1, kind: input, shape index: {}]
  %s2 = inlined_call_operand.vmem [shape: f32[1,128], index: 2, kind: input, shape index: {}]
  %s3 = inlined_call_operand.hbm [shape: f32[16,128], index: 3, kind: output, shape index: {}]
  %s4 = sld [smem:[#allocation0]]
  $region30: #{tpu_custom_call.1} parent=0
    _
  %s6 = ssub.s32 1, %s4
  %s7 = scalar_select 0, %s6, %s4
  $region1: #{tpu_custom_call.1} parent=0
    #allocation2 [shape = 'u8[4096]{0}', space=vmem, size = 0x1000, scoped, tag = 'input window, operand 0, single buffered']
    #allocation3 [shape = 's32[1]{0}', space=sflag, size = 0x4, scoped, tag = 'scoped memory for tpu_custom_call.1']
    #allocation4 [shape = 's32[1]{0}', space=sflag, size = 0x4, scoped, tag = 'scoped memory for tpu_custom_call.1']
    #allocation5 [shape = 'u8[12288]{0}', space=vmem, size = 0x3000, scoped, tag = 'input window, operand 1, single buffered']
    #allocation6 [shape = 's32[1]{0}', space=sflag, size = 0x4, scoped, tag = 'scoped memory for tpu_custom_call.1']
    #allocation7 [shape = 'u8[8192]{0}', space=vmem, size = 0x2000, scoped, tag = 'output window, operand 0, single buffered']
    %8 = vsyncpa [#allocation3], 0
    %9 = vsyncpa [#allocation6], 0
    %10 = vsyncpa [#allocation4], 0
    // Predicated region
    $region2: #{tpu_custom_call.1} parent=1 // pred_check
      _
    $region3: #{tpu_custom_call.1} parent=1 // pred_check_branch
      %12 = sbr.rel (0) target = $region5
    $region4: #{tpu_custom_call.1} parent=1 // pred_region
      %14 = vsyncadd [#allocation3], 0
      %s15 = sshll.u32 %s0, 4
      %s16 = int_to_ptr.hbm [resolvable:$true] %s15
      %s17 = sshll.u32 [#allocation2], 4
      %s18 = int_to_ptr.vmem [resolvable:$true] %s17
      %23 = dma.hbm_to_vmem [thread:$0]  %s16, 128, %s18, [#allocation3], 64, 64, 4
    $region5: #{tpu_custom_call.1} parent=1 // pred_fallthru
      _
    // Predicated region
    $region6: #{tpu_custom_call.1} parent=1 // pred_check
      _
    $region7: #{tpu_custom_call.1} parent=1 // pred_check_branch
      %25 = sbr.rel (0) target = $region9
    $region8: #{tpu_custom_call.1} parent=1 // pred_region
      %27 = vsyncadd [#allocation6], 0
      %s28 = sshll.u32 %s1, 4
      %s29 = int_to_ptr.hbm [resolvable:$true] %s28
      %s30 = sshll.u32 [#allocation5], 4
      %s31 = int_to_ptr.vmem [resolvable:$true] %s30
      %36 = dma.hbm_to_vmem [thread:$0]  %s29, 384, %s31, [#allocation6], 64, 64, 4
    $region9: #{tpu_custom_call.1} parent=1 // pred_fallthru
      _
    // Predicated region
    $region10: #{tpu_custom_call.1} parent=1 // pred_check
      _
    $region11: #{tpu_custom_call.1} parent=1 // pred_check_branch
      %38 = sbr.rel (0) target = $region13
    $region12: #{tpu_custom_call.1} parent=1 // pred_region
      _
    $region13: #{tpu_custom_call.1} parent=1 // pred_fallthru
      _
    // Predicated region
    $region14: #{tpu_custom_call.1} parent=1 // pred_check
      _
    $region15: #{tpu_custom_call.1} parent=1 // pred_check_branch
      %40 = sbr.rel (0) target = $region17
    $region16: #{tpu_custom_call.1} parent=1 // pred_region
      %42 = dma.done [#allocation3], 128
    $region17: #{tpu_custom_call.1} parent=1 // pred_fallthru
      _
    // Predicated region
    $region18: #{tpu_custom_call.1} parent=1 // pred_check
      _
    $region19: #{tpu_custom_call.1} parent=1 // pred_check_branch
      %44 = sbr.rel (0) target = $region21
    $region20: #{tpu_custom_call.1} parent=1 // pred_region
      %46 = dma.done [#allocation6], 384
    $region21: #{tpu_custom_call.1} parent=1 // pred_fallthru
      _
    %v48 = vld [vmem:[#allocation2] sm:$0xf]
    %v49 = vld [vmem:[#allocation2 + $0x4] sm:$0xf]
    %v50 = vld [vmem:[#allocation5] sm:$0xf]
    %v51 = vld [vmem:[#allocation5 + $0x4] sm:$0xf]
    %v52 = vld [vmem:[#allocation5 + $0x8] sm:$0xf]
    %v53 = vld [vmem:[#allocation5 + $0xc] sm:$0xf]
    %v54 = vld [vmem:[#allocation5 + $0x10] sm:$0xf]
    %v55 = vld [vmem:[#allocation5 + $0x14] sm:$0xf]
    %v56 = vld [vmem:[%s2] sm:$0x1]
    %v58 = vperm.slane %v56, 0
    %v62 = vunpack.c.l.b16 %v48
    %v63 = vunpack.c.l.b16 %v49
    %v64 = vpack.c.b16 %v63, %v62
    %v71 = vunpack.c.l.b16 %v50
    %v72 = vunpack.c.l.b16 %v51
    %v73 = vunpack.c.l.b16 %v52
    %v74 = vunpack.c.l.b16 %v53
    %v75 = vunpack.c.l.b16 %v54
    %v76 = vunpack.c.l.b16 %v55
    %v77 = vpack.c.b16 %v72, %v71
    %v78 = vpack.c.b16 %v74, %v73
    %v79 = vpack.c.b16 %v76, %v75
    %vm83 = vcmask 392192
    %v85 = vsel %vm83, %v64, 0
    %87 = vmatpush.bf16.msra.mxu0 0
    %88 = vmatpush.bf16.msra.mxu0 0
    %89 = vmatpush.bf16.msra.mxu0 0
    %90 = vmatpush.bf16.msra.mxu0 0
    %91 = vmatpush.bf16.msra.mxu0 0
    %92 = vmatpush.bf16.msra.mxu0 %v79
    %93 = vmatpush.bf16.msra.mxu0 %v78
    %94 = vmatpush.bf16.msra.mxu0 %v77
    %95 = vmatmul.bf16.gmra.mxu0 %v85
    %v96 = vpop.f32.mrf.mxu0
    %v97 = vadd.f32 %v58, %v96
    %v98 = vpop.f32.mrf.mxu0
    %v99 = vadd.f32 %v58, %v98
    %100 = vdwg.mxu0
    %101 = vst [vmem:[#allocation7] sm:$0xff] %v97
    %102 = vst [vmem:[#allocation7 + $0x8] sm:$0xff] %v99
    // Predicated region
    $region22: #{tpu_custom_call.1} parent=1 // pred_check
      _
    $region23: #{tpu_custom_call.1} parent=1 // pred_check_branch
      %104 = sbr.rel (0) target = $region25
    $region24: #{tpu_custom_call.1} parent=1 // pred_region
      %106 = vsyncadd [#allocation4], 0
      %s107 = sshll.u32 [#allocation7], 4
      %s108 = int_to_ptr.vmem [resolvable:$true] %s107
      %s109 = sshll.u32 %s3, 4
      %s110 = int_to_ptr.hbm [resolvable:$true] %s109
      %115 = dma.vmem_to_hbm [thread:$0]  %s108, 256, %s110, [#allocation4], 128, 128, 8
    $region25: #{tpu_custom_call.1} parent=1 // pred_fallthru
      _
    // Predicated region
    $region26: #{tpu_custom_call.1} parent=1 // pred_check
      _
    $region27: #{tpu_custom_call.1} parent=1 // pred_check_branch
      %117 = sbr.rel (0) target = $region29
    $region28: #{tpu_custom_call.1} parent=1 // pred_region
      %119 = dma.done [#allocation4], 256
    $region29: #{tpu_custom_call.1} parent=1 // pred_fallthru
      _
    %120 = vsyncpa [#allocation3], 1
    %121 = vsyncpa [#allocation6], 1
    %122 = vsyncpa [#allocation4], 1

</llo_original>
